<compile_context>
chip_gen: v6e
topology: v6e:2x2x1
jax: 0.10.0
libtpu: 0.0.40
codegen_flags: <defaults>
</compile_context>

<pallas_src>
import functools

import jax
import jax.numpy as jnp
from jax.experimental import pallas as pl
from jax.experimental.pallas import tpu as pltpu


def _round_up(x, m):
    return ((x + m - 1) // m) * m


# ----------------------------------------------------------------------------
# Pallas kernel: one spatial tile of one image, both 1x1 convs on one x load
# ----------------------------------------------------------------------------
def _head_kernel(x_ref, wc_ref, bc_ref, wr_ref, br_ref, cls_ref, reg_ref):
    """cls = W_cls @ x + b_cls ; reg = W_reg @ x + b_reg  for one tile.

    x_ref:   (1, Cin, T)        activation tile (lanes = spatial positions)
    wc_ref:  (cls_out, Cin)     resident across the grid (index_map -> (0,0))
    bc_ref:  (cls_out, 1)
    wr_ref:  (reg_out, Cin)
    br_ref:  (reg_out, 1)
    cls_ref: (1, cls_out, T)    lane-dense output tile
    reg_ref: (1, reg_out, T)
    """
    x = x_ref[0]
    cls = jnp.dot(wc_ref[...], x, preferred_element_type=jnp.float32)
    reg = jnp.dot(wr_ref[...], x, preferred_element_type=jnp.float32)
    cls_ref[0] = (cls + bc_ref[...]).astype(cls_ref.dtype)
    reg_ref[0] = (reg + br_ref[...]).astype(reg_ref.dtype)


# ----------------------------------------------------------------------------
# Per-level wrapper (jitted): reads the NCHW level in place, two outputs
# ----------------------------------------------------------------------------
@functools.partial(jax.jit, static_argnames=("tile_hw", "out_dtype"))
def _head_level_forward(x, w_cls, b_cls, w_reg, b_reg, *, tile_hw, out_dtype):
    N, cin, H, W = x.shape
    hw = H * W
    cls_out = w_cls.shape[0]
    reg_out = w_reg.shape[0]

    x_flat = x.reshape(N, cin, hw)          # free reshape (still NCHW in HBM)

    # Spatial (lane-axis) tile: always a multiple of 128, or the full H*W
    # extent for tiny levels (full-dim blocks are always legal).
    target = max(128, (int(tile_hw) // 128) * 128)
    lane_tile = min(target, _round_up(hw, 128))
    if lane_tile >= hw:
        lane_tile = hw
        grid_hw = 1
    else:
        grid_hw = pl.cdiv(hw, lane_tile)    # ragged tail -> masked boundary

    # Double-buffered working set + resident weights, with headroom.
    p_bytes = jnp.dtype(x_flat.dtype).itemsize
    o_bytes = jnp.dtype(out_dtype).itemsize
    vmem_need = (2 * (cin * lane_tile * p_bytes
                      + (cls_out + reg_out) * lane_tile * o_bytes)
                 + 2 * (cls_out + reg_out) * (cin + 1) * p_bytes
                 + (4 << 20))
    vmem_limit = int(min(100 << 20, max(32 << 20, vmem_need)))

    cls_flat, reg_flat = pl.pallas_call(
        _head_kernel,
        out_shape=(jax.ShapeDtypeStruct((N, cls_out, hw), out_dtype),
                   jax.ShapeDtypeStruct((N, reg_out, hw), out_dtype)),
        grid_spec=pltpu.PrefetchScalarGridSpec(
            num_scalar_prefetch=0,
            grid=(grid_hw, N),              # spatial axis leads -> balanced
            in_specs=[                      # megacore split even when N == 1
                pl.BlockSpec((1, cin, lane_tile), lambda j, n: (n, 0, j)),
                pl.BlockSpec((cls_out, cin), lambda j, n: (0, 0)),
                pl.BlockSpec((cls_out, 1), lambda j, n: (0, 0)),
                pl.BlockSpec((reg_out, cin), lambda j, n: (0, 0)),
                pl.BlockSpec((reg_out, 1), lambda j, n: (0, 0)),
            ],
            out_specs=[
                pl.BlockSpec((1, cls_out, lane_tile), lambda j, n: (n, 0, j)),
                pl.BlockSpec((1, reg_out, lane_tile), lambda j, n: (n, 0, j)),
            ],
        ),
        compiler_params=pltpu.CompilerParams(
            dimension_semantics=("parallel", "parallel"),
            vmem_limit_bytes=vmem_limit),
    )(x_flat, w_cls, b_cls, w_reg, b_reg)

    cls_score = cls_flat.reshape(N, cls_out, H, W)   # free reshapes inside jit
    bbox_pred = reg_flat.reshape(N, reg_out, H, W)
    return cls_score, bbox_pred


# ----------------------------------------------------------------------------
# AnchorHead (forward only); compute delegated to the per-level Pallas kernel
# ----------------------------------------------------------------------------
class AnchorHeadPallas:
    def __init__(self, num_classes, in_channels, feat_channels=256,
                 anchor_scales=(8, 16, 32), anchor_ratios=(0.5, 1.0, 2.0),
                 use_sigmoid_cls=True, tile_hw=512,
                 param_dtype=jnp.float32, out_dtype=jnp.float32, key=None):
        if key is None:
            key = jax.random.PRNGKey(0)
        self.num_classes = num_classes
        self.in_channels = in_channels
        self.feat_channels = feat_channels
        self.num_anchors = len(anchor_ratios) * len(anchor_scales)
        self.use_sigmoid_cls = use_sigmoid_cls
        self.cls_out_channels = (num_classes - 1) if use_sigmoid_cls \
            else num_classes
        if self.cls_out_channels <= 0:
            raise ValueError("num_classes={} is too small".format(num_classes))
        # tile_hw: 512 is a good default on v5e/v6e; use 1024-2048 on v7x
        # (the vmem_limit is derived automatically). bf16 param/out dtypes are
        # valid on all of v5e/v6e/v7x (accumulation stays f32 in the MXU).
        self.tile_hw = int(tile_hw)
        self.param_dtype = param_dtype
        self.out_dtype = out_dtype

        self.cls_out = self.num_anchors * self.cls_out_channels
        self.reg_out = self.num_anchors * 4

        # Deterministic init mirroring normal_init(std=0.01), bias=0.
        # 1x1 conv weight (Cout, Cin, 1, 1) stored as (Cout, Cin). f32 masters
        # are kept for the reference check; kernel copies are cast once.
        k1, k2 = jax.random.split(key)
        self.w_cls = 0.01 * jax.random.normal(
            k1, (self.cls_out, in_channels), dtype=jnp.float32)
        self.b_cls = jnp.zeros((self.cls_out,), dtype=jnp.float32)
        self.w_reg = 0.01 * jax.random.normal(
            k2, (self.reg_out, in_channels), dtype=jnp.float32)
        self.b_reg = jnp.zeros((self.reg_out,), dtype=jnp.float32)

        self._w_cls_k = self.w_cls.astype(param_dtype)
        self._b_cls_k = self.b_cls.reshape(self.cls_out, 1).astype(param_dtype)
        self._w_reg_k = self.w_reg.astype(param_dtype)
        self._b_reg_k = self.b_reg.reshape(self.reg_out, 1).astype(param_dtype)

    def forward(self, feats):
        """feats: list of multi-level NCHW maps -> (cls_scores, bbox_preds)."""
        cls_scores, bbox_preds = [], []
        for f in feats:
            cs, bp = _head_level_forward(
                f.astype(self.param_dtype),
                self._w_cls_k, self._b_cls_k, self._w_reg_k, self._b_reg_k,
                tile_hw=self.tile_hw, out_dtype=self.out_dtype)
            cls_scores.append(cs)
            bbox_preds.append(bp)
        return cls_scores, bbox_preds

    def forward_single(self, x):
        cls_scores, bbox_preds = self.forward([x])
        return cls_scores[0], bbox_preds[0]

    # TODO(synk): loss / get_anchors / get_bboxes are data-dependent host-side
    # postprocessing (anchor generation, sampling, top-k, NMS), not part of
    # the forward hot path; they are not implemented as Pallas kernels.


# ----------------------------------------------------------------------------
# Reference (pure jnp, NCHW 1x1 conv) for a sanity check
# ----------------------------------------------------------------------------
def _reference_conv1x1(x, w, b):
    # x: (N, Cin, H, W), w: (Cout, Cin), b: (Cout,)
    y = jnp.einsum("oc,nchw->nohw", w, x, precision=jax.lax.Precision.HIGHEST)
    return y + b[None, :, None, None]


if __name__ == "__main__":
    head = AnchorHeadPallas(num_classes=4, in_channels=4,
                            key=jax.random.PRNGKey(0))

    # Two pyramid levels, batch=2, channels=4, NCHW.
    kx1, kx2 = jax.random.split(jax.random.PRNGKey(1))
    feat0 = jax.random.normal(kx1, (2, 4, 16, 16), dtype=jnp.float32)
    feat1 = jax.random.normal(kx2, (2, 4, 8, 8), dtype=jnp.float32)
    feats = [feat0, feat1]

    cls_scores, bbox_preds = head.forward(feats)
    jax.block_until_ready((cls_scores, bbox_preds))

    # Sanity check vs pure-JAX reference.
    for f, cs, bp in zip(feats, cls_scores, bbox_preds):
        ref_cls = _reference_conv1x1(f, head.w_cls, head.b_cls)
        ref_reg = _reference_conv1x1(f, head.w_reg, head.b_reg)
        assert cs.shape == ref_cls.shape and bp.shape == ref_reg.shape
        assert float(jnp.max(jnp.abs(cs - ref_cls))) < 1e-3
        assert float(jnp.max(jnp.abs(bp - ref_reg))) < 1e-3

    print("KERNEL_OK")
</pallas_src>

<mosaic_0001>
module attributes {stable_mosaic.version = 11 : i64} {
  func.func @_head_kernel(%arg0: i32, %arg1: i32, %arg2: memref<1x4x256xf32, #tpu.memory_space<vmem>>, %arg3: memref<27x4xf32, #tpu.memory_space<vmem>>, %arg4: memref<27x1xf32, #tpu.memory_space<vmem>>, %arg5: memref<36x4xf32, #tpu.memory_space<vmem>>, %arg6: memref<36x1xf32, #tpu.memory_space<vmem>>, %arg7: memref<1x27x256xf32, #tpu.memory_space<vmem>>, %arg8: memref<1x36x256xf32, #tpu.memory_space<vmem>>) attributes {dimension_semantics = [#tpu.dimension_semantics<parallel>, #tpu.dimension_semantics<parallel>], iteration_bounds = array<i64: 1, 2>, scalar_prefetch = 0 : i64, scratch_operands = 0 : i64, tpu.core_type = #tpu.core_type<tc>, window_params = [{transform_indices = @transform_0, window_bounds = array<i64: 1, 4, 256>}, {pipeline_mode = #tpu.pipeline_mode<synchronous>, transform_indices = @transform_1, window_bounds = array<i64: 27, 4>}, {pipeline_mode = #tpu.pipeline_mode<synchronous>, transform_indices = @transform_2, window_bounds = array<i64: 27, 1>}, {pipeline_mode = #tpu.pipeline_mode<synchronous>, transform_indices = @transform_3, window_bounds = array<i64: 36, 4>}, {pipeline_mode = #tpu.pipeline_mode<synchronous>, transform_indices = @transform_4, window_bounds = array<i64: 36, 1>}, {transform_indices = @transform_5, window_bounds = array<i64: 1, 27, 256>}, {transform_indices = @transform_6, window_bounds = array<i64: 1, 36, 256>}]} {
    %c0 = arith.constant 0 : index
    %c0_0 = arith.constant 0 : index
    %c0_1 = arith.constant 0 : index
    %0 = vector.load %arg2[%c0, %c0_0, %c0_1] : memref<1x4x256xf32, #tpu.memory_space<vmem>>, vector<1x4x256xf32>
    %1 = vector.shape_cast %0 : vector<1x4x256xf32> to vector<4x256xf32>
    %c0_2 = arith.constant 0 : index
    %c0_3 = arith.constant 0 : index
    %2 = vector.load %arg3[%c0_2, %c0_3] : memref<27x4xf32, #tpu.memory_space<vmem>>, vector<27x4xf32>
    %cst = arith.constant dense<0.000000e+00> : vector<27x256xf32>
    %3 = tpu.matmul %2, %1, %cst {dimension_numbers = #tpu.dot_dimension_numbers<[1], [0], [0], [1], [0, 0, 1, 1], [], []>} : vector<27x4xf32>, vector<4x256xf32>, vector<27x256xf32> -> vector<27x256xf32>
    %c0_4 = arith.constant 0 : index
    %c0_5 = arith.constant 0 : index
    %4 = vector.load %arg5[%c0_4, %c0_5] : memref<36x4xf32, #tpu.memory_space<vmem>>, vector<36x4xf32>
    %cst_6 = arith.constant dense<0.000000e+00> : vector<36x256xf32>
    %5 = tpu.matmul %4, %1, %cst_6 {dimension_numbers = #tpu.dot_dimension_numbers<[1], [0], [0], [1], [0, 0, 1, 1], [], []>} : vector<36x4xf32>, vector<4x256xf32>, vector<36x256xf32> -> vector<36x256xf32>
    %c0_7 = arith.constant 0 : index
    %c0_8 = arith.constant 0 : index
    %6 = vector.load %arg4[%c0_7, %c0_8] : memref<27x1xf32, #tpu.memory_space<vmem>>, vector<27x1xf32>
    %7 = vector.broadcast %6 : vector<27x1xf32> to vector<27x256xf32>
    %8 = arith.addf %3, %7 : vector<27x256xf32>
    %c0_9 = arith.constant 0 : index
    %c0_10 = arith.constant 0 : index
    %c0_11 = arith.constant 0 : index
    %9 = vector.load %arg7[%c0_9, %c0_10, %c0_11] : memref<1x27x256xf32, #tpu.memory_space<vmem>>, vector<1x27x256xf32>
    %10 = vector.shape_cast %9 : vector<1x27x256xf32> to vector<27x256xf32>
    %11 = vector.shape_cast %8 : vector<27x256xf32> to vector<1x27x256xf32>
    tpu.vector_store %arg7[%c0_9, %c0_10, %c0_11], %11 {strides = array<i32>} : memref<1x27x256xf32, #tpu.memory_space<vmem>>, vector<1x27x256xf32>,
    %c0_12 = arith.constant 0 : index
    %c0_13 = arith.constant 0 : index
    %12 = vector.load %arg6[%c0_12, %c0_13] : memref<36x1xf32, #tpu.memory_space<vmem>>, vector<36x1xf32>
    %13 = vector.broadcast %12 : vector<36x1xf32> to vector<36x256xf32>
    %14 = arith.addf %5, %13 : vector<36x256xf32>
    %c0_14 = arith.constant 0 : index
    %c0_15 = arith.constant 0 : index
    %c0_16 = arith.constant 0 : index
    %15 = vector.load %arg8[%c0_14, %c0_15, %c0_16] : memref<1x36x256xf32, #tpu.memory_space<vmem>>, vector<1x36x256xf32>
    %16 = vector.shape_cast %15 : vector<1x36x256xf32> to vector<36x256xf32>
    %17 = vector.shape_cast %14 : vector<36x256xf32> to vector<1x36x256xf32>
    tpu.vector_store %arg8[%c0_14, %c0_15, %c0_16], %17 {strides = array<i32>} : memref<1x36x256xf32, #tpu.memory_space<vmem>>, vector<1x36x256xf32>,
    return
  }
  func.func @transform_0(%arg0: i32, %arg1: i32) -> (i32, i32, i32) {
    %c0_i32 = arith.constant 0 : i32
    %c0_i32_0 = arith.constant 0 : i32
    return %arg1, %c0_i32, %arg0 : i32, i32, i32
  }
  func.func @transform_1(%arg0: i32, %arg1: i32) -> (i32, i32) {
    %c0_i32 = arith.constant 0 : i32
    %c0_i32_0 = arith.constant 0 : i32
    %c0_i32_1 = arith.constant 0 : i32
    return %c0_i32, %c0_i32_0 : i32, i32
  }
  func.func @transform_2(%arg0: i32, %arg1: i32) -> (i32, i32) {
    %c0_i32 = arith.constant 0 : i32
    %c0_i32_0 = arith.constant 0 : i32
    %c0_i32_1 = arith.constant 0 : i32
    return %c0_i32, %c0_i32_0 : i32, i32
  }
  func.func @transform_3(%arg0: i32, %arg1: i32) -> (i32, i32) {
    %c0_i32 = arith.constant 0 : i32
    %c0_i32_0 = arith.constant 0 : i32
    %c0_i32_1 = arith.constant 0 : i32
    return %c0_i32, %c0_i32_0 : i32, i32
  }
  func.func @transform_4(%arg0: i32, %arg1: i32) -> (i32, i32) {
    %c0_i32 = arith.constant 0 : i32
    %c0_i32_0 = arith.constant 0 : i32
    %c0_i32_1 = arith.constant 0 : i32
    return %c0_i32, %c0_i32_0 : i32, i32
  }
  func.func @transform_5(%arg0: i32, %arg1: i32) -> (i32, i32, i32) {
    %c0_i32 = arith.constant 0 : i32
    %c0_i32_0 = arith.constant 0 : i32
    return %arg1, %c0_i32, %arg0 : i32, i32, i32
  }
  func.func @transform_6(%arg0: i32, %arg1: i32) -> (i32, i32, i32) {
    %c0_i32 = arith.constant 0 : i32
    %c0_i32_0 = arith.constant 0 : i32
    return %arg1, %c0_i32, %arg0 : i32, i32, i32
  }
}

</mosaic_0001>

<llo_original>
// kernel: _head_level_forward.1
$region0: #{_head_level_forward.1}
  #allocation0 [shape = 'u32[]', space=smem, size = 0x4, offset = 0x4, fixed_abs, tag = 'smem constant byte address 0x4 - core index']
  #allocation1 [shape = 'u32[144,128]{1,0:T(1,128)}', space=vmem, size = 0x12000, scoped, tag = 'internal scratch']
  %s0 = inlined_call_operand.vmem [shape: f32[2,4,256], index: 0, kind: input, shape index: {}]
  %s1 = inlined_call_operand.vmem [shape: f32[27,4], index: 1, kind: input, shape index: {}]
  %s2 = inlined_call_operand.vmem [shape: f32[27,1], index: 2, kind: input, shape index: {}]
  %s3 = inlined_call_operand.vmem [shape: f32[36,4], index: 3, kind: input, shape index: {}]
  %s4 = inlined_call_operand.vmem [shape: f32[36,1], index: 4, kind: input, shape index: {}]
  %s5 = inlined_call_operand.vmem [shape: f32[2,27,256], index: 5, kind: output, shape index: {0}]
  %s6 = inlined_call_operand.vmem [shape: f32[2,36,256], index: 6, kind: output, shape index: {1}]
  %7 = xla_tuple %s5, %s6
  %s8 = sld [smem:[#allocation0]]
  $region61: #{_head_level_forward.1} parent=0
    _
  %s10 = ssub.s32 1, %s8
  %s11 = scalar_select 0, %s10, %s8
  loop: start=0, step=1, limit=4
  $region2: #{_head_level_forward.1} parent=0 // loop_pre_header
    _
  $region3: #{_head_level_forward.1} parent=0 // loop_header
    %s13 = sphi 0, %s17
    %p14 = scmp.ge.s32.totalorder %s13, 4
    %s20 = sphi 0, %s32
    %s21 = sphi 0, %s28
    %s22 = sphi 0, %s20
    %s23 = sphi 0, %s21
    %s24 = sphi 0, %s22
    %s25 = sphi 0, %s23
    %s37 = sphi 0, %s39
    %s40 = sphi 0, %s37
    %s41 = sphi 0, %s40
    %s57 = sphi 0, %s41
    %s61 = sphi 0, %s61
    %s63 = sphi 0, %s61
    %s64 = sphi 0, %s63
    %s78 = sphi 0, %s64
    %s82 = sphi 0, %s82
    %s84 = sphi 0, %s82
    %s85 = sphi 0, %s84
    %s99 = sphi 0, %s85
    %s103 = sphi 0, %s103
    %s105 = sphi 0, %s103
    %s106 = sphi 0, %s105
    %s120 = sphi 0, %s106
    %s124 = sphi 0, %s124
    %s126 = sphi 0, %s124
    %s127 = sphi 0, %s126
    %s141 = sphi 0, %s127
    %s149 = sphi 0, %s151
    %s152 = sphi 0, %s149
    %s153 = sphi 0, %s152
    %s169 = sphi 0, %s153
    %s177 = sphi 0, %s179
    %s180 = sphi 0, %s177
    %s181 = sphi 0, %s180
    %s197 = sphi 0, %s181
  $region4: #{_head_level_forward.1} parent=0 // loop_header_branch
    %16 = sbr.rel (%p14) target = $region8
  $region5: #{_head_level_forward.1} parent=0 // loop_body
    %s18 = ssub.s32 %s13, 1
    %s19 = ssub.s32 %s13, 2
    %s26 = sadd.s32 1, %s21
    %p27 = scmp.ge.s32.totalorder %s26, 2
    %s28 = scalar_select %p27, 0, %s26
    %s29 = sadd.s32 1, %s20
    %s30 = scalar_select %p27, %s29, %s20
    %p31 = scmp.ge.s32.totalorder %s30, 1
    %s32 = scalar_select %p31, 0, %s30
    %s33 = ssub.s32 %s21, %s28
    %s34 = ssub.s32 %s20, %s32
    %s35 = sor.u32 %s33, %s34
    %p36 = scmp.eq.s32.totalorder %s35, 0
    %s38 = sadd.s32 %s37, 1
    %s39 = scalar_select %p36, %s37, %s38
    %p42 = pneg %p36
    %p43 = scmp.eq.s32.totalorder %s13, 1
    %p44 = por %p42, %p43
    %p45 = scmp.ne.s32.totalorder %s37, %s40
    %p46 = scmp.eq.s32.totalorder %s13, 0
    %p47 = por %p45, %p46
    %p48 = scmp.ne.s32.totalorder %s37, %s40
    %p49 = scmp.eq.s32.totalorder %s18, 1
    %p50 = por %p48, %p49
    %p51 = scmp.ne.s32.totalorder %s40, %s41
    %p52 = scmp.eq.s32.totalorder %s18, 0
    %p53 = por %p51, %p52
    %p54 = scmp.ne.s32.totalorder %s40, %s41
    %p55 = scmp.eq.s32.totalorder %s19, 1
    %p56 = por %p54, %p55
    %p58 = scmp.ne.s32.totalorder %s41, %s57
    %p59 = scmp.eq.s32.totalorder %s19, 0
    %p60 = por %p58, %p59
    %s62 = sadd.s32 %s61, 1
    %p65 = scmp.eq.s32.totalorder %s13, 1
    %p66 = scmp.ne.s32.totalorder %s61, %s63
    %p67 = scmp.eq.s32.totalorder %s13, 0
    %p68 = por %p66, %p67
    %p69 = scmp.ne.s32.totalorder %s61, %s63
    %p70 = scmp.eq.s32.totalorder %s18, 1
    %p71 = por %p69, %p70
    %p72 = scmp.ne.s32.totalorder %s63, %s64
    %p73 = scmp.eq.s32.totalorder %s18, 0
    %p74 = por %p72, %p73
    %p75 = scmp.ne.s32.totalorder %s63, %s64
    %p76 = scmp.eq.s32.totalorder %s19, 1
    %p77 = por %p75, %p76
    %p79 = scmp.ne.s32.totalorder %s64, %s78
    %p80 = scmp.eq.s32.totalorder %s19, 0
    %p81 = por %p79, %p80
    %s83 = sadd.s32 %s82, 1
    %p86 = scmp.eq.s32.totalorder %s13, 1
    %p87 = scmp.ne.s32.totalorder %s82, %s84
    %p88 = scmp.eq.s32.totalorder %s13, 0
    %p89 = por %p87, %p88
    %p90 = scmp.ne.s32.totalorder %s82, %s84
    %p91 = scmp.eq.s32.totalorder %s18, 1
    %p92 = por %p90, %p91
    %p93 = scmp.ne.s32.totalorder %s84, %s85
    %p94 = scmp.eq.s32.totalorder %s18, 0
    %p95 = por %p93, %p94
    %p96 = scmp.ne.s32.totalorder %s84, %s85
    %p97 = scmp.eq.s32.totalorder %s19, 1
    %p98 = por %p96, %p97
    %p100 = scmp.ne.s32.totalorder %s85, %s99
    %p101 = scmp.eq.s32.totalorder %s19, 0
    %p102 = por %p100, %p101
    %s104 = sadd.s32 %s103, 1
    %p107 = scmp.eq.s32.totalorder %s13, 1
    %p108 = scmp.ne.s32.totalorder %s103, %s105
    %p109 = scmp.eq.s32.totalorder %s13, 0
    %p110 = por %p108, %p109
    %p111 = scmp.ne.s32.totalorder %s103, %s105
    %p112 = scmp.eq.s32.totalorder %s18, 1
    %p113 = por %p111, %p112
    %p114 = scmp.ne.s32.totalorder %s105, %s106
    %p115 = scmp.eq.s32.totalorder %s18, 0
    %p116 = por %p114, %p115
    %p117 = scmp.ne.s32.totalorder %s105, %s106
    %p118 = scmp.eq.s32.totalorder %s19, 1
    %p119 = por %p117, %p118
    %p121 = scmp.ne.s32.totalorder %s106, %s120
    %p122 = scmp.eq.s32.totalorder %s19, 0
    %p123 = por %p121, %p122
    %s125 = sadd.s32 %s124, 1
    %p128 = scmp.eq.s32.totalorder %s13, 1
    %p129 = scmp.ne.s32.totalorder %s124, %s126
    %p130 = scmp.eq.s32.totalorder %s13, 0
    %p131 = por %p129, %p130
    %p132 = scmp.ne.s32.totalorder %s124, %s126
    %p133 = scmp.eq.s32.totalorder %s18, 1
    %p134 = por %p132, %p133
    %p135 = scmp.ne.s32.totalorder %s126, %s127
    %p136 = scmp.eq.s32.totalorder %s18, 0
    %p137 = por %p135, %p136
    %p138 = scmp.ne.s32.totalorder %s126, %s127
    %p139 = scmp.eq.s32.totalorder %s19, 1
    %p140 = por %p138, %p139
    %p142 = scmp.ne.s32.totalorder %s127, %s141
    %p143 = scmp.eq.s32.totalorder %s19, 0
    %p144 = por %p142, %p143
    %s145 = ssub.s32 %s21, %s28
    %s146 = ssub.s32 %s20, %s32
    %s147 = sor.u32 %s145, %s146
    %p148 = scmp.eq.s32.totalorder %s147, 0
    %s150 = sadd.s32 %s149, 1
    %s151 = scalar_select %p148, %s149, %s150
    %p154 = pneg %p148
    %p155 = scmp.eq.s32.totalorder %s13, 1
    %p156 = por %p154, %p155
    %p157 = scmp.ne.s32.totalorder %s149, %s152
    %p158 = scmp.eq.s32.totalorder %s13, 0
    %p159 = por %p157, %p158
    %p160 = scmp.ne.s32.totalorder %s149, %s152
    %p161 = scmp.eq.s32.totalorder %s18, 1
    %p162 = por %p160, %p161
    %p163 = scmp.ne.s32.totalorder %s152, %s153
    %p164 = scmp.eq.s32.totalorder %s18, 0
    %p165 = por %p163, %p164
    %p166 = scmp.ne.s32.totalorder %s152, %s153
    %p167 = scmp.eq.s32.totalorder %s19, 1
    %p168 = por %p166, %p167
    %p170 = scmp.ne.s32.totalorder %s153, %s169
    %p171 = scmp.eq.s32.totalorder %s19, 0
    %p172 = por %p170, %p171
    %s173 = ssub.s32 %s21, %s28
    %s174 = ssub.s32 %s20, %s32
    %s175 = sor.u32 %s173, %s174
    %p176 = scmp.eq.s32.totalorder %s175, 0
    %s178 = sadd.s32 %s177, 1
    %s179 = scalar_select %p176, %s177, %s178
    %p182 = pneg %p176
    %p183 = scmp.eq.s32.totalorder %s13, 1
    %p184 = por %p182, %p183
    %p185 = scmp.ne.s32.totalorder %s177, %s180
    %p186 = scmp.eq.s32.totalorder %s13, 0
    %p187 = por %p185, %p186
    %p188 = scmp.ne.s32.totalorder %s177, %s180
    %p189 = scmp.eq.s32.totalorder %s18, 1
    %p190 = por %p188, %p189
    %p191 = scmp.ne.s32.totalorder %s180, %s181
    %p192 = scmp.eq.s32.totalorder %s18, 0
    %p193 = por %p191, %p192
    %p194 = scmp.ne.s32.totalorder %s180, %s181
    %p195 = scmp.eq.s32.totalorder %s19, 1
    %p196 = por %p194, %p195
    %p198 = scmp.ne.s32.totalorder %s181, %s197
    %p199 = scmp.eq.s32.totalorder %s19, 0
    %p200 = por %p198, %p199
    %p201 = scmp.le.s32.totalorder 1, %s13
    %p202 = scmp.lt.s32.totalorder %s13, 3
    %p203 = pnand %p201, %p202
    %p204 = pneg %p203
    // Predicated region
    $region9: #{_head_level_forward.1} parent=5 // pred_check
      _
    $region10: #{_head_level_forward.1} parent=5 // pred_check_branch
      %206 = sbr.rel (%p203) target = $region12
    $region11: #{_head_level_forward.1} parent=5 // pred_region
      %s207 = ssub.s32 %s13, 1
      // Predicated region
      $region13: #{_head_level_forward.1} parent=11 // pred_check
        %p208 = pneg %p74
      $region14: #{_head_level_forward.1} parent=11 // pred_check_branch
        %210 = sbr.rel (%p208) target = $region16
      $region15: #{_head_level_forward.1} parent=11 // pred_region
        _
      $region16: #{_head_level_forward.1} parent=11 // pred_fallthru
        _
      // Predicated region
      $region17: #{_head_level_forward.1} parent=11 // pred_check
        %p211 = pneg %p95
      $region18: #{_head_level_forward.1} parent=11 // pred_check_branch
        %213 = sbr.rel (%p211) target = $region20
      $region19: #{_head_level_forward.1} parent=11 // pred_region
        _
      $region20: #{_head_level_forward.1} parent=11 // pred_fallthru
        _
      // Predicated region
      $region21: #{_head_level_forward.1} parent=11 // pred_check
        %p214 = pneg %p116
      $region22: #{_head_level_forward.1} parent=11 // pred_check_branch
        %216 = sbr.rel (%p214) target = $region24
      $region23: #{_head_level_forward.1} parent=11 // pred_region
        _
      $region24: #{_head_level_forward.1} parent=11 // pred_fallthru
        _
      // Predicated region
      $region25: #{_head_level_forward.1} parent=11 // pred_check
        %p217 = pneg %p137
      $region26: #{_head_level_forward.1} parent=11 // pred_check_branch
        %219 = sbr.rel (%p217) target = $region28
      $region27: #{_head_level_forward.1} parent=11 // pred_region
        _
      $region28: #{_head_level_forward.1} parent=11 // pred_fallthru
        _
    $region12: #{_head_level_forward.1} parent=5 // pred_fallthru
      _
    %p220 = scmp.lt.s32.totalorder %s13, 2
    // Predicated region
    $region29: #{_head_level_forward.1} parent=5 // pred_check
      %p221 = pneg %p220
    $region30: #{_head_level_forward.1} parent=5 // pred_check_branch
      %223 = sbr.rel (%p221) target = $region32
    $region31: #{_head_level_forward.1} parent=5 // pred_region
      // Predicated region
      $region33: #{_head_level_forward.1} parent=31 // pred_check
        %p224 = pneg %p47
      $region34: #{_head_level_forward.1} parent=31 // pred_check_branch
        %226 = sbr.rel (%p224) target = $region36
      $region35: #{_head_level_forward.1} parent=31 // pred_region
        %s227 = smul.u32 2, %s20
        %p228 = scmp.lt.s32.totalorder %s21, 1
        %s229 = scalar_select %p228, %s21, 1
        %p230 = scmp.lt.s32.totalorder %s227, 1
        %s231 = scalar_select %p230, %s227, 1
        %s232 = smul.addr %s229, 2
        %s233 = sadd.s32 %s231, %s232
        %s234 = smul.addr %s233, 4
        %s235 = scalar_lea.vmem %s0, %s234
        %s236 = smul.u32 2, %s20
      $region36: #{_head_level_forward.1} parent=31 // pred_fallthru
        _
    $region32: #{_head_level_forward.1} parent=5 // pred_fallthru
      _
    %p237 = scmp.le.s32.totalorder 1, %s13
    %p238 = scmp.lt.s32.totalorder %s13, 3
    %p239 = pnand %p237, %p238
    %p240 = pneg %p239
    // Predicated region
    $region37: #{_head_level_forward.1} parent=5 // pred_check
      _
    $region38: #{_head_level_forward.1} parent=5 // pred_check_branch
      %242 = sbr.rel (%p239) target = $region40
    $region39: #{_head_level_forward.1} parent=5 // pred_region
      %s243 = ssub.s32 %s13, 1
      %s244 = smul.u32 2, %s22
      %p245 = scmp.lt.s32.totalorder %s23, 1
      %s246 = scalar_select %p245, %s23, 1
      %p247 = scmp.lt.s32.totalorder %s244, 1
      %s248 = scalar_select %p247, %s244, 1
      %s249 = smul.addr %s246, 2
      %s250 = sadd.s32 %s248, %s249
      %s251 = smul.addr %s250, 4
      %s252 = scalar_lea.vmem %s0, %s251
      %p253 = pneg %p53
      %p254 = pneg %p50
      %p255 = pneg %p74
      %p256 = pneg %p71
      %p257 = pneg %p95
      %p258 = pneg %p92
      %p259 = pneg %p116
      %p260 = pneg %p113
      %p261 = pneg %p137
      %p262 = pneg %p134
      %p263 = pneg %p165
      %p264 = pneg %p162
      %s265 = smul.u32 2, %s22
      %p266 = scmp.lt.s32.totalorder %s23, 1
      %s267 = scalar_select %p266, %s23, 1
      %p268 = scmp.lt.s32.totalorder %s265, 1
      %s269 = scalar_select %p268, %s265, 1
      %s270 = smul.addr %s267, 8
      %s271 = sadd.s32 %s269, %s270
      %s272 = smul.addr %s271, 8
      %s273 = scalar_lea.vmem %s5, %s272
      %p274 = pneg %p193
      %p275 = pneg %p190
      %s276 = smul.u32 2, %s22
      %p277 = scmp.lt.s32.totalorder %s23, 1
      %s278 = scalar_select %p277, %s23, 1
      %p279 = scmp.lt.s32.totalorder %s276, 1
      %s280 = scalar_select %p279, %s276, 1
      %s281 = smul.addr %s278, 10
      %s282 = sadd.s32 %s280, %s281
      %s283 = smul.addr %s282, 8
      %s284 = scalar_lea.vmem %s6, %s283
      %s285 = smul.u32 2, %s22
      %p286 = scmp.lt.s32.totalorder %s23, 1
      %s287 = scalar_select %p286, %s23, 1
      %p288 = scmp.lt.s32.totalorder %s285, 1
      %s289 = scalar_select %p288, %s285, 1
      %s290 = smul.addr %s287, 2
      %s291 = sadd.s32 %s289, %s290
      %s292 = smul.addr %s291, 4
      %s293 = scalar_lea.vmem %s0, %s292
      %s294 = smul.u32 2, %s22
      %s295 = smul.u32 2, %s22
      %p296 = scmp.lt.s32.totalorder %s23, 1
      %s297 = scalar_select %p296, %s23, 1
      %p298 = scmp.lt.s32.totalorder %s295, 1
      %s299 = scalar_select %p298, %s295, 1
      %s300 = smul.addr %s297, 8
      %s301 = sadd.s32 %s299, %s300
      %s302 = smul.addr %s301, 8
      %s303 = scalar_lea.vmem %s5, %s302
      %s304 = smul.u32 2, %s22
      %s305 = smul.u32 2, %s22
      %p306 = scmp.lt.s32.totalorder %s23, 1
      %s307 = scalar_select %p306, %s23, 1
      %p308 = scmp.lt.s32.totalorder %s305, 1
      %s309 = scalar_select %p308, %s305, 1
      %s310 = smul.addr %s307, 10
      %s311 = sadd.s32 %s309, %s310
      %s312 = smul.addr %s311, 8
      %s313 = scalar_lea.vmem %s6, %s312
      %s314 = smul.u32 2, %s22
      %v315 = vld [vmem:[%s293] sm:$0xff]
      %v316 = vld [vmem:[%s1] sm:$0xff]
      %v317 = vld [vmem:[%s1 + $0x8] sm:$0xff]
      %v318 = vld [vmem:[%s1 + $0x10] sm:$0xff]
      %v319 = vld [vmem:[%s1 + $0x18] sm:$0x7]
      %v320 = vld [vmem:[%s3] sm:$0xff]
      %v321 = vld [vmem:[%s3 + $0x8] sm:$0xff]
      %v322 = vld [vmem:[%s3 + $0x10] sm:$0xff]
      %v323 = vld [vmem:[%s3 + $0x18] sm:$0xff]
      %v324 = vld [vmem:[%s3 + $0x20] sm:$0xf]
      %v325 = vld [vmem:[%s2] sm:$0xff]
      %v326 = vld [vmem:[%s2 + $0x8] sm:$0xff]
      %v327 = vld [vmem:[%s2 + $0x10] sm:$0xff]
      %v328 = vld [vmem:[%s2 + $0x18] sm:$0x7]
      %330 = vset.pattern.permute.xlu0 0
      %331 = vperm.xlu0 %330, %v325
      %v332 = vpop.permute.xlu0 %331
      %335 = vset.pattern.permute.xlu0 0
      %336 = vperm.xlu0 %335, %v326
      %v337 = vpop.permute.xlu0 %336
      %340 = vset.pattern.permute.xlu0 0
      %341 = vperm.xlu0 %340, %v327
      %v342 = vpop.permute.xlu0 %341
      %345 = vset.pattern.permute.xlu0 0
      %346 = vperm.xlu0 %345, %v328
      %v347 = vpop.permute.xlu0 %346
      %v350 = vcombine.high %v315, %v315
      %vm351 = vcmask 31744
      %v353 = vsel %vm351, %v316, 0
      %v356 = vsel %vm351, %v317, 0
      %v359 = vsel %vm351, %v318, 0
      %v362 = vsel %vm351, %v319, 0
      %vm364 = vcmask 1043456
      %v365 = vsel %vm364, %v315, 0
      %v367 = vsel %vm364, %v350, 0
      %369 = vmatprep.subr.mxu0 0.0
      %370 = vmatpush1.msra.mxu0 0.0
      %371 = vmatprep.subr.mxu0 0.0
      %372 = vmatpush1.msra.mxu0 0.0
      %373 = vmatprep.subr.mxu0 0.0
      %374 = vmatpush1.msra.mxu0 0.0
      %375 = vmatprep.subr.mxu0 0.0
      %376 = vmatpush1.msra.mxu0 0.0
      %377 = vmatprep.subr.mxu0 0.0
      %378 = vmatpush1.msra.mxu0 0.0
      %379 = vmatprep.subr.mxu0 0.0
      %380 = vmatpush1.msra.mxu0 0.0
      %381 = vmatprep.subr.mxu0 0.0
      %382 = vmatpush1.msra.mxu0 0.0
      %383 = vmatprep.subr.mxu0 0.0
      %384 = vmatpush1.msra.mxu0 0.0
      %385 = vmatprep.subr.mxu0 0.0
      %386 = vmatpush1.msra.mxu0 0.0
      %387 = vmatprep.subr.mxu0 0.0
      %388 = vmatpush1.msra.mxu0 0.0
      %389 = vmatprep.subr.mxu0 0.0
      %390 = vmatpush1.msra.mxu0 0.0
      %391 = vmatprep.subr.mxu0 0.0
      %392 = vmatpush1.msra.mxu0 0.0
      %393 = vmatprep.subr.mxu0 0.0
      %394 = vmatpush1.msra.mxu0 0.0
      %395 = vmatprep.subr.mxu0 0.0
      %396 = vmatpush1.msra.mxu0 0.0
      %397 = vmatprep.subr.mxu0 0.0
      %398 = vmatpush1.msra.mxu0 0.0
      %399 = vmatprep.subr.mxu0 %v367
      %400 = vmatpush1.msra.mxu0 %v365
      %401 = vmatprep.subr.mxu0 0.0
      %402 = vmatpush2.msra.mxu0 0.0
      %403 = vmatprep.subr.mxu0 0.0
      %404 = vmatpush2.msra.mxu0 0.0
      %405 = vmatprep.subr.mxu0 0.0
      %406 = vmatpush2.msra.mxu0 0.0
      %407 = vmatprep.subr.mxu0 0.0
      %408 = vmatpush2.msra.mxu0 0.0
      %409 = vmatprep.subr.mxu0 0.0
      %410 = vmatpush2.msra.mxu0 0.0
      %411 = vmatprep.subr.mxu0 0.0
      %412 = vmatpush2.msra.mxu0 0.0
      %413 = vmatprep.subr.mxu0 0.0
      %414 = vmatpush2.msra.mxu0 0.0
      %415 = vmatprep.subr.mxu0 0.0
      %416 = vmatpush2.msra.mxu0 0.0
      %417 = vmatprep.subr.mxu0 0.0
      %418 = vmatpush2.msra.mxu0 0.0
      %419 = vmatprep.subr.mxu0 0.0
      %420 = vmatpush2.msra.mxu0 0.0
      %421 = vmatprep.subr.mxu0 0.0
      %422 = vmatpush2.msra.mxu0 0.0
      %423 = vmatprep.subr.mxu0 0.0
      %424 = vmatpush2.msra.mxu0 0.0
      %425 = vmatprep.subr.mxu0 0.0
      %426 = vmatpush2.msra.mxu0 0.0
      %427 = vmatprep.subr.mxu0 0.0
      %428 = vmatpush2.msra.mxu0 0.0
      %429 = vmatprep.subr.mxu0 0.0
      %430 = vmatpush2.msra.mxu0 0.0
      %431 = vmatprep.subr.mxu0 0.0
      %432 = vmatpush2.msra.mxu0 0.0
      %433 = vmatprep.mubr.f32.mxu0 0.0
      %434 = vmatmul.mubr.f32.gmra.mxu0 %v353
      %v435 = vpop.f32.mrf.mxu0
      %v436 = vadd.f32 %v332, %v435
      %v437 = vpop.f32.mrf.mxu0
      %v438 = vadd.f32 %v332, %v437
      %439 = vmatprep.mubr.f32.mxu0 0.0
      %440 = vmatmul.mubr.f32.gmra.mxu0 %v356
      %v441 = vpop.f32.mrf.mxu0
      %v442 = vadd.f32 %v337, %v441
      %v443 = vpop.f32.mrf.mxu0
      %v444 = vadd.f32 %v337, %v443
      %445 = vmatprep.mubr.f32.mxu0 0.0
      %446 = vmatmul.mubr.f32.gmra.mxu0 %v359
      %v447 = vpop.f32.mrf.mxu0
      %v448 = vadd.f32 %v342, %v447
      %v449 = vpop.f32.mrf.mxu0
      %v450 = vadd.f32 %v342, %v449
      %451 = vmatprep.mubr.f32.mxu0 0.0
      %452 = vmatmul.mubr.f32.gmra.mxu0 %v362
      %v453 = vpop.f32.mrf.mxu0
      %v454 = vadd.f32 %v347, %v453
      %v455 = vpop.f32.mrf.mxu0
      %v456 = vadd.f32 %v347, %v455
      %457 = vdwg.mxu0
      %458 = vst [vmem:[%s303] sm:$0xff] %v436
      %459 = vst [vmem:[%s303 + $0x8] sm:$0xff] %v438
      %460 = vst [vmem:[%s303 + $0x10] sm:$0xff] %v442
      %461 = vst [vmem:[%s303 + $0x18] sm:$0xff] %v444
      %462 = vst [vmem:[%s303 + $0x20] sm:$0xff] %v448
      %463 = vst [vmem:[%s303 + $0x28] sm:$0xff] %v450
      %464 = vst [vmem:[%s303 + $0x30] sm:$0x7] %v454
      %465 = vst [vmem:[%s303 + $0x38] sm:$0x7] %v456
      %v466 = vld [vmem:[%s4] sm:$0xff]
      %v467 = vld [vmem:[%s4 + $0x8] sm:$0xff]
      %v468 = vld [vmem:[%s4 + $0x10] sm:$0xff]
      %v469 = vld [vmem:[%s4 + $0x18] sm:$0xff]
      %v470 = vld [vmem:[%s4 + $0x20] sm:$0xf]
      %472 = vset.pattern.permute.xlu0 0
      %473 = vperm.xlu0 %472, %v466
      %v474 = vpop.permute.xlu0 %473
      %477 = vset.pattern.permute.xlu0 0
      %478 = vperm.xlu0 %477, %v467
      %v479 = vpop.permute.xlu0 %478
      %482 = vset.pattern.permute.xlu0 0
      %483 = vperm.xlu0 %482, %v468
      %v484 = vpop.permute.xlu0 %483
      %487 = vset.pattern.permute.xlu0 0
      %488 = vperm.xlu0 %487, %v469
      %v489 = vpop.permute.xlu0 %488
      %492 = vset.pattern.permute.xlu0 0
      %493 = vperm.xlu0 %492, %v470
      %v494 = vpop.permute.xlu0 %493
      %v497 = vsel %vm351, %v320, 0
      %v500 = vsel %vm351, %v321, 0
      %v503 = vsel %vm351, %v322, 0
      %v506 = vsel %vm351, %v323, 0
      %v509 = vsel %vm351, %v324, 0
      %511 = vmatprep.subr.mxu0 0.0
      %512 = vmatpush1.msra.mxu0 0.0
      %513 = vmatprep.subr.mxu0 0.0
      %514 = vmatpush1.msra.mxu0 0.0
      %515 = vmatprep.subr.mxu0 0.0
      %516 = vmatpush1.msra.mxu0 0.0
      %517 = vmatprep.subr.mxu0 0.0
      %518 = vmatpush1.msra.mxu0 0.0
      %519 = vmatprep.subr.mxu0 0.0
      %520 = vmatpush1.msra.mxu0 0.0
      %521 = vmatprep.subr.mxu0 0.0
      %522 = vmatpush1.msra.mxu0 0.0
      %523 = vmatprep.subr.mxu0 0.0
      %524 = vmatpush1.msra.mxu0 0.0
      %525 = vmatprep.subr.mxu0 0.0
      %526 = vmatpush1.msra.mxu0 0.0
      %527 = vmatprep.subr.mxu0 0.0
      %528 = vmatpush1.msra.mxu0 0.0
      %529 = vmatprep.subr.mxu0 0.0
      %530 = vmatpush1.msra.mxu0 0.0
      %531 = vmatprep.subr.mxu0 0.0
      %532 = vmatpush1.msra.mxu0 0.0
      %533 = vmatprep.subr.mxu0 0.0
      %534 = vmatpush1.msra.mxu0 0.0
      %535 = vmatprep.subr.mxu0 0.0
      %536 = vmatpush1.msra.mxu0 0.0
      %537 = vmatprep.subr.mxu0 0.0
      %538 = vmatpush1.msra.mxu0 0.0
      %539 = vmatprep.subr.mxu0 0.0
      %540 = vmatpush1.msra.mxu0 0.0
      %541 = vmatprep.subr.mxu0 %v367
      %542 = vmatpush1.msra.mxu0 %v365
      %543 = vmatprep.subr.mxu0 0.0
      %544 = vmatpush2.msra.mxu0 0.0
      %545 = vmatprep.subr.mxu0 0.0
      %546 = vmatpush2.msra.mxu0 0.0
      %547 = vmatprep.subr.mxu0 0.0
      %548 = vmatpush2.msra.mxu0 0.0
      %549 = vmatprep.subr.mxu0 0.0
      %550 = vmatpush2.msra.mxu0 0.0
      %551 = vmatprep.subr.mxu0 0.0
      %552 = vmatpush2.msra.mxu0 0.0
      %553 = vmatprep.subr.mxu0 0.0
      %554 = vmatpush2.msra.mxu0 0.0
      %555 = vmatprep.subr.mxu0 0.0
      %556 = vmatpush2.msra.mxu0 0.0
      %557 = vmatprep.subr.mxu0 0.0
      %558 = vmatpush2.msra.mxu0 0.0
      %559 = vmatprep.subr.mxu0 0.0
      %560 = vmatpush2.msra.mxu0 0.0
      %561 = vmatprep.subr.mxu0 0.0
      %562 = vmatpush2.msra.mxu0 0.0
      %563 = vmatprep.subr.mxu0 0.0
      %564 = vmatpush2.msra.mxu0 0.0
      %565 = vmatprep.subr.mxu0 0.0
      %566 = vmatpush2.msra.mxu0 0.0
      %567 = vmatprep.subr.mxu0 0.0
      %568 = vmatpush2.msra.mxu0 0.0
      %569 = vmatprep.subr.mxu0 0.0
      %570 = vmatpush2.msra.mxu0 0.0
      %571 = vmatprep.subr.mxu0 0.0
      %572 = vmatpush2.msra.mxu0 0.0
      %573 = vmatprep.subr.mxu0 0.0
      %574 = vmatpush2.msra.mxu0 0.0
      %575 = vmatprep.mubr.f32.mxu0 0.0
      %576 = vmatmul.mubr.f32.gmra.mxu0 %v497
      %v577 = vpop.f32.mrf.mxu0
      %v578 = vadd.f32 %v474, %v577
      %v579 = vpop.f32.mrf.mxu0
      %v580 = vadd.f32 %v474, %v579
      %581 = vmatprep.mubr.f32.mxu0 0.0
      %582 = vmatmul.mubr.f32.gmra.mxu0 %v500
      %v583 = vpop.f32.mrf.mxu0
      %v584 = vadd.f32 %v479, %v583
      %v585 = vpop.f32.mrf.mxu0
      %v586 = vadd.f32 %v479, %v585
      %587 = vmatprep.mubr.f32.mxu0 0.0
      %588 = vmatmul.mubr.f32.gmra.mxu0 %v503
      %v589 = vpop.f32.mrf.mxu0
      %v590 = vadd.f32 %v484, %v589
      %v591 = vpop.f32.mrf.mxu0
      %v592 = vadd.f32 %v484, %v591
      %593 = vmatprep.mubr.f32.mxu0 0.0
      %594 = vmatmul.mubr.f32.gmra.mxu0 %v506
      %v595 = vpop.f32.mrf.mxu0
      %v596 = vadd.f32 %v489, %v595
      %v597 = vpop.f32.mrf.mxu0
      %v598 = vadd.f32 %v489, %v597
      %599 = vmatprep.mubr.f32.mxu0 0.0
      %600 = vmatmul.mubr.f32.gmra.mxu0 %v509
      %v601 = vpop.f32.mrf.mxu0
      %v602 = vadd.f32 %v494, %v601
      %v603 = vpop.f32.mrf.mxu0
      %v604 = vadd.f32 %v494, %v603
      %605 = vdwg.mxu0
      %606 = vst [vmem:[%s313] sm:$0xff] %v578
      %607 = vst [vmem:[%s313 + $0x8] sm:$0xff] %v580
      %608 = vst [vmem:[%s313 + $0x10] sm:$0xff] %v584
      %609 = vst [vmem:[%s313 + $0x18] sm:$0xff] %v586
      %610 = vst [vmem:[%s313 + $0x20] sm:$0xff] %v590
      %611 = vst [vmem:[%s313 + $0x28] sm:$0xff] %v592
      %612 = vst [vmem:[%s313 + $0x30] sm:$0xff] %v596
      %613 = vst [vmem:[%s313 + $0x38] sm:$0xff] %v598
      %614 = vst [vmem:[%s313 + $0x40] sm:$0xf] %v602
      %615 = vst [vmem:[%s313 + $0x48] sm:$0xf] %v604
      %s616 = smul.u32 2, %s22
      %p617 = scmp.lt.s32.totalorder %s23, 1
      %s618 = scalar_select %p617, %s23, 1
      %p619 = scmp.lt.s32.totalorder %s616, 1
      %s620 = scalar_select %p619, %s616, 1
      %s621 = smul.addr %s618, 8
      %s622 = sadd.s32 %s620, %s621
      %s623 = smul.addr %s622, 8
      %s624 = scalar_lea.vmem %s5, %s623
      %s625 = smul.u32 2, %s22
      %p626 = scmp.lt.s32.totalorder %s23, 1
      %s627 = scalar_select %p626, %s23, 1
      %p628 = scmp.lt.s32.totalorder %s625, 1
      %s629 = scalar_select %p628, %s625, 1
      %s630 = smul.addr %s627, 10
      %s631 = sadd.s32 %s629, %s630
      %s632 = smul.addr %s631, 8
      %s633 = scalar_lea.vmem %s6, %s632
      // Predicated region
      $region41: #{_head_level_forward.1} parent=39 // pred_check
        %p634 = pneg %p162
      $region42: #{_head_level_forward.1} parent=39 // pred_check_branch
        %636 = sbr.rel (%p634) target = $region44
      $region43: #{_head_level_forward.1} parent=39 // pred_region
        %s637 = smul.u32 2, %s22
      $region44: #{_head_level_forward.1} parent=39 // pred_fallthru
        _
      // Predicated region
      $region45: #{_head_level_forward.1} parent=39 // pred_check
        %p638 = pneg %p190
      $region46: #{_head_level_forward.1} parent=39 // pred_check_branch
        %640 = sbr.rel (%p638) target = $region48
      $region47: #{_head_level_forward.1} parent=39 // pred_region
        %s641 = smul.u32 2, %s22
      $region48: #{_head_level_forward.1} parent=39 // pred_fallthru
        _
    $region40: #{_head_level_forward.1} parent=5 // pred_fallthru
      _
    %p642 = scmp.le.s32.totalorder 2, %s13
    // Predicated region
    $region49: #{_head_level_forward.1} parent=5 // pred_check
      %p643 = pneg %p642
    $region50: #{_head_level_forward.1} parent=5 // pred_check_branch
      %645 = sbr.rel (%p643) target = $region52
    $region51: #{_head_level_forward.1} parent=5 // pred_region
      %s646 = ssub.s32 %s13, 2
      // Predicated region
      $region53: #{_head_level_forward.1} parent=51 // pred_check
        %p647 = pneg %p168
      $region54: #{_head_level_forward.1} parent=51 // pred_check_branch
        %649 = sbr.rel (%p647) target = $region56
      $region55: #{_head_level_forward.1} parent=51 // pred_region
        %s650 = smul.u32 2, %s24
        %p651 = scmp.lt.s32.totalorder %s25, 1
        %s652 = scalar_select %p651, %s25, 1
        %p653 = scmp.lt.s32.totalorder %s650, 1
        %s654 = scalar_select %p653, %s650, 1
        %s655 = smul.addr %s652, 8
        %s656 = sadd.s32 %s654, %s655
        %s657 = smul.addr %s656, 8
        %s658 = scalar_lea.vmem %s5, %s657
      $region56: #{_head_level_forward.1} parent=51 // pred_fallthru
        _
      // Predicated region
      $region57: #{_head_level_forward.1} parent=51 // pred_check
        %p659 = pneg %p196
      $region58: #{_head_level_forward.1} parent=51 // pred_check_branch
        %661 = sbr.rel (%p659) target = $region60
      $region59: #{_head_level_forward.1} parent=51 // pred_region
        %s662 = smul.u32 2, %s24
        %p663 = scmp.lt.s32.totalorder %s25, 1
        %s664 = scalar_select %p663, %s25, 1
        %p665 = scmp.lt.s32.totalorder %s662, 1
        %s666 = scalar_select %p665, %s662, 1
        %s667 = smul.addr %s664, 10
        %s668 = sadd.s32 %s666, %s667
        %s669 = smul.addr %s668, 8
        %s670 = scalar_lea.vmem %s6, %s669
      $region60: #{_head_level_forward.1} parent=51 // pred_fallthru
        _
    $region52: #{_head_level_forward.1} parent=5 // pred_fallthru
      _
  $region6: #{_head_level_forward.1} parent=0 // loop_footer
    %s17 = sadd.s32 1, %s13
  $region7: #{_head_level_forward.1} parent=0 // loop_footer_branch
    %12 = sbr.rel target = $region3
  $region8: #{_head_level_forward.1} parent=0 // loop_exit
    _

</llo_original>
